<compile_context>
chip_gen: v7x
topology: tpu7x:2x2x1
jax: 0.10.0
libtpu: 0.0.40
codegen_flags: <defaults>
</compile_context>

<pallas_src>
import jax
import jax.numpy as jnp
import numpy as np
from jax.experimental import pallas as pl
from jax.experimental.pallas import tpu as pltpu


# ---------------------------------------------------------------------------
# Pallas kernel (fused two-head MLP on one batch tile)
# refs: state, action, W_s, W_a, b0, [Wi, bi]*(n_linear-1), q_out(2, tb)
# ---------------------------------------------------------------------------
def _make_critic_kernel(n_linear):
    n_rest = n_linear - 1  # fused layers after layer 0 (>= 1)

    def kernel(state_ref, action_ref, w0s_ref, w0a_ref, b0_ref, *refs):
        rest = refs[: 2 * n_rest]
        q_ref = refs[2 * n_rest]                      # (2, tb) fused output

        # Layer 0: split matmul over [state | action]; f32 accumulation.
        h = (jnp.dot(state_ref[...], w0s_ref[...],
                     preferred_element_type=jnp.float32)
             + jnp.dot(action_ref[...], w0a_ref[...],
                       preferred_element_type=jnp.float32)
             + b0_ref[...])
        h = h * jax.nn.sigmoid(h)                     # SiLU (EUP)

        # Hidden block-diagonal fused layers.
        for i in range(n_rest - 1):
            w = rest[2 * i][...]
            b = rest[2 * i + 1][...]
            h = jnp.dot(h, w, preferred_element_type=jnp.float32) + b
            h = h * jax.nn.sigmoid(h)

        # Final fused layer, produced TRANSPOSED so batch maps to lanes:
        #   q[o, b] = sum_k W_T[o, k] * h[b, k] + bias[o]
        w_last_t = rest[2 * (n_rest - 1)][...]        # (2, 2H)
        b_last = rest[2 * (n_rest - 1) + 1][...]      # (2, 1)
        q = jax.lax.dot_general(
            w_last_t, h,
            dimension_numbers=(((1,), (1,)), ((), ())),   # A @ B^T
            preferred_element_type=jnp.float32)
        q_ref[...] = q + b_last                       # (2, tb), lane-dense

    return kernel


# ---------------------------------------------------------------------------
# One-time parameter fusion / packing (model init, not per step)
# ---------------------------------------------------------------------------
def prepare_critic_params(q1_params, q2_params, obs_dim):
    """Fuse the two heads into one f32 parameter chain.

    q*_params: list of (W, b) with W stored as (in, out) = torch W^T.
    Layer 0 weights are concatenated on the output axis and split into
    state / action blocks; deeper layers are block-diagonal; the LAST fused
    layer is stored transposed (2, 2H) so the kernel's output is (2, tb).
    Returns (flat_params_tuple, n_linear).
    """
    n_linear = len(q1_params)
    H = int(q1_params[0][0].shape[1])

    w1_0, b1_0 = q1_params[0]
    w2_0, b2_0 = q2_params[0]
    w0 = jnp.concatenate([jnp.asarray(w1_0, jnp.float32),
                          jnp.asarray(w2_0, jnp.float32)], axis=1)   # (D, 2H)
    flat = [
        w0[:obs_dim],                                                # W_s
        w0[obs_dim:],                                                # W_a
        jnp.concatenate([jnp.asarray(b1_0, jnp.float32),
                         jnp.asarray(b2_0, jnp.float32)])[None, :],  # (1, 2H)
    ]
    for i in range(1, n_linear):
        w1, b1 = q1_params[i]
        w2, b2 = q2_params[i]
        w1 = jnp.asarray(w1, jnp.float32)
        w2 = jnp.asarray(w2, jnp.float32)
        o1, o2 = int(w1.shape[1]), int(w2.shape[1])
        bf = jnp.concatenate([jnp.asarray(b1, jnp.float32),
                              jnp.asarray(b2, jnp.float32)])
        if i == n_linear - 1:
            # Last layer stored TRANSPOSED: (o1+o2, 2H), block-diagonal.
            wft = jnp.zeros((o1 + o2, 2 * H), jnp.float32)
            wft = wft.at[:o1, :H].set(w1.T).at[o1:, H:].set(w2.T)
            flat.append(wft)
            flat.append(bf[:, None])                                 # (2, 1)
        else:
            wf = jnp.zeros((2 * H, o1 + o2), jnp.float32)
            wf = wf.at[:H, :o1].set(w1).at[H:, o1:].set(w2)          # block-diag
            flat.append(wf)
            flat.append(bf[None, :])                                 # (1, 2H)
    return tuple(flat), n_linear


def _round_up(x, m):
    return ((x + m - 1) // m) * m


# ---------------------------------------------------------------------------
# Forward wrapper: matches Critic.forward(state, action) -> (q1, q2)
# ---------------------------------------------------------------------------
def critic_forward_pallas(state, action, fused_params, n_linear, *,
                          batch_tile=4096):
    state = jnp.asarray(state, jnp.float32)
    action = jnp.asarray(action, jnp.float32)
    # Mirror the torch squeeze(1) behavior when the middle dim is 1.
    if state.ndim == 3 and state.shape[1] == 1:
        state = state[:, 0, :]
    if action.ndim == 3 and action.shape[1] == 1:
        action = action[:, 0, :]

    B, obs_dim = state.shape
    act_dim = action.shape[1]
    kernel = _make_critic_kernel(n_linear)

    # Advisory cost estimate for XLA's scheduler.
    H2 = int(fused_params[2].shape[1])                # 2 * hidden_dim
    flops = 2 * B * (obs_dim + act_dim) * H2
    for i in range(n_linear - 1):
        w = fused_params[3 + 2 * i]
        flops += 2 * B * int(w.shape[0]) * int(w.shape[1])
    bytes_accessed = (sum(int(np.prod(p.shape)) * p.dtype.itemsize
                          for p in fused_params)
                      + state.size * 4 + action.size * 4 + 2 * B * 4)
    cost = pl.CostEstimate(flops=int(flops),
                           transcendentals=int(B * H2 * (n_linear - 1)),
                           bytes_accessed=int(bytes_accessed))

    # Single lane-dense output slab: row 0 = q1, row 1 = q2, batch on lanes.
    out_shape = jax.ShapeDtypeStruct((2, B), jnp.float32)

    if B <= batch_tile:
        # Grid-less single block: minimal dispatch overhead; explicit VMEM.
        vmem = pl.BlockSpec(memory_space=pltpu.MemorySpace.VMEM)
        q = pl.pallas_call(
            kernel,
            out_shape=out_shape,
            in_specs=[vmem] * (2 + len(fused_params)),
            out_specs=pl.BlockSpec(memory_space=pltpu.MemorySpace.VMEM),
            cost_estimate=cost,
            compiler_params=pltpu.CompilerParams(
                vmem_limit_bytes=32 * 1024 * 1024),
        )(state, action, *fused_params)
    else:
        # Large batch: tile the batch. Tile count rounded to a multiple of 2
        # (v7x megacore balance); tb rounded to a multiple of 128 so the
        # (2, tb) output block is lane-dense / unmasked.
        num_tiles = max(2, pl.cdiv(B, batch_tile))
        if num_tiles % 2:
            num_tiles += 1
        tb = _round_up(pl.cdiv(B, num_tiles), 128)
        num_tiles = pl.cdiv(B, tb)

        in_specs = [pl.BlockSpec((tb, obs_dim), lambda i: (i, 0)),
                    pl.BlockSpec((tb, act_dim), lambda i: (i, 0))]
        # Weights/biases: constant block index -> resident in VMEM.
        in_specs += [pl.BlockSpec(p.shape, lambda i: (0, 0))
                     for p in fused_params]
        out_specs = pl.BlockSpec((2, tb), lambda i: (0, i))
        q = pl.pallas_call(
            kernel,
            grid=(num_tiles,),
            in_specs=in_specs,
            out_specs=out_specs,
            out_shape=out_shape,
            cost_estimate=cost,
            compiler_params=pltpu.CompilerParams(
                dimension_semantics=("parallel",),
                vmem_limit_bytes=32 * 1024 * 1024),
        )(state, action, *fused_params)

    # Cheap wrapper-side slices to match the torch (B, 1), (B, 1) outputs.
    return q[0][:, None], q[1][:, None]


# ---------------------------------------------------------------------------
# Deterministic parameter init (kaiming-normal weights like init_weights(),
# PyTorch-default uniform biases). Weights stored as (in, out) = W^T.
# ---------------------------------------------------------------------------
def init_mlp_params(key, input_size, hidden_dim, hidden_layers):
    sizes = [input_size] + [hidden_dim] * hidden_layers + [1]
    params = []
    for i in range(len(sizes) - 1):
        fan_in, fan_out = sizes[i], sizes[i + 1]
        key, kw, kb = jax.random.split(key, 3)
        std = np.sqrt(2.0 / fan_in)  # kaiming normal, fan_in, relu
        w = jax.random.normal(kw, (fan_in, fan_out), jnp.float32) * std
        bound = 1.0 / np.sqrt(fan_in)
        b = jax.random.uniform(kb, (fan_out,), jnp.float32, -bound, bound)
        params.append((w, b))
    return key, params


# ---------------------------------------------------------------------------
# Pure-JAX reference for verification.
# ---------------------------------------------------------------------------
def _ref_mlp(x, params):
    h = x
    for i, (w, b) in enumerate(params):
        h = h @ jnp.asarray(w, jnp.float32) + b
        if i < len(params) - 1:
            h = h * jax.nn.sigmoid(h)
    return h


def _ref_forward(state, action, q1_params, q2_params):
    x = jnp.concatenate([state, action], axis=-1)
    return _ref_mlp(x, q1_params), _ref_mlp(x, q2_params)


if __name__ == "__main__":
    # Shapes implied by the module: obs_dim=11, act_dim=3 -> input_size=14;
    # hidden_dim=32, hidden_layers=2.
    batch, obs_dim, act_dim = 2, 11, 3
    hidden_dim, hidden_layers = 32, 2
    input_size = obs_dim + act_dim

    key = jax.random.PRNGKey(0)
    key, q1_params = init_mlp_params(key, input_size, hidden_dim, hidden_layers)
    key, q2_params = init_mlp_params(key, input_size, hidden_dim, hidden_layers)

    # One-time fusion/packing (kept as the stored model state).
    fused_params, n_linear = prepare_critic_params(q1_params, q2_params, obs_dim)

    key, ks, ka = jax.random.split(key, 3)
    state = jax.random.normal(ks, (batch, obs_dim), jnp.float32)
    action = jax.random.normal(ka, (batch, act_dim), jnp.float32)

    # --- small batch: grid-less single-block path -------------------------
    q1, q2 = critic_forward_pallas(state, action, fused_params, n_linear)
    q1 = jax.block_until_ready(q1)
    q2 = jax.block_until_ready(q2)
    assert q1.shape == (batch, 1) and q2.shape == (batch, 1)

    q1_ref, q2_ref = _ref_forward(state, action, q1_params, q2_params)
    np.testing.assert_allclose(np.asarray(q1), np.asarray(q1_ref),
                               rtol=1e-2, atol=1e-2)
    np.testing.assert_allclose(np.asarray(q2), np.asarray(q2_ref),
                               rtol=1e-2, atol=1e-2)

    # --- large batch: batch-tiled grid path (weights resident, parallel) ---
    big_b = 1200  # forces the grid path when batch_tile=512
    key, ks2, ka2 = jax.random.split(key, 3)
    state_b = jax.random.normal(ks2, (big_b, obs_dim), jnp.float32)
    action_b = jax.random.normal(ka2, (big_b, act_dim), jnp.float32)
    q1b, q2b = critic_forward_pallas(state_b, action_b, fused_params, n_linear,
                                     batch_tile=512)
    q1b = jax.block_until_ready(q1b)
    q2b = jax.block_until_ready(q2b)
    assert q1b.shape == (big_b, 1) and q2b.shape == (big_b, 1)
    q1b_ref, q2b_ref = _ref_forward(state_b, action_b, q1_params, q2_params)
    np.testing.assert_allclose(np.asarray(q1b), np.asarray(q1b_ref),
                               rtol=1e-2, atol=1e-2)
    np.testing.assert_allclose(np.asarray(q2b), np.asarray(q2b_ref),
                               rtol=1e-2, atol=1e-2)

    print("KERNEL_OK")
</pallas_src>

<mosaic_0001>
module attributes {stable_mosaic.version = 11 : i64} {
  func.func @kernel(%arg0: memref<2x11xf32, #tpu.memory_space<vmem>>, %arg1: memref<2x3xf32, #tpu.memory_space<vmem>>, %arg2: memref<11x64xf32, #tpu.memory_space<vmem>>, %arg3: memref<3x64xf32, #tpu.memory_space<vmem>>, %arg4: memref<1x64xf32, #tpu.memory_space<vmem>>, %arg5: memref<64x64xf32, #tpu.memory_space<vmem>>, %arg6: memref<1x64xf32, #tpu.memory_space<vmem>>, %arg7: memref<2x64xf32, #tpu.memory_space<vmem>>, %arg8: memref<2x1xf32, #tpu.memory_space<vmem>>, %arg9: memref<2x2xf32, #tpu.memory_space<vmem>>) attributes {dimension_semantics = [], scalar_prefetch = 0 : i64, scratch_operands = 0 : i64, tpu.core_type = #tpu.core_type<tc>} {
    %c0 = arith.constant 0 : index
    %c0_0 = arith.constant 0 : index
    %0 = vector.load %arg0[%c0, %c0_0] : memref<2x11xf32, #tpu.memory_space<vmem>>, vector<2x11xf32>
    %c0_1 = arith.constant 0 : index
    %c0_2 = arith.constant 0 : index
    %1 = vector.load %arg2[%c0_1, %c0_2] : memref<11x64xf32, #tpu.memory_space<vmem>>, vector<11x64xf32>
    %cst = arith.constant dense<0.000000e+00> : vector<2x64xf32>
    %2 = tpu.matmul %0, %1, %cst {dimension_numbers = #tpu.dot_dimension_numbers<[1], [0], [0], [1], [0, 0, 1, 1], [], []>} : vector<2x11xf32>, vector<11x64xf32>, vector<2x64xf32> -> vector<2x64xf32>
    %c0_3 = arith.constant 0 : index
    %c0_4 = arith.constant 0 : index
    %3 = vector.load %arg1[%c0_3, %c0_4] : memref<2x3xf32, #tpu.memory_space<vmem>>, vector<2x3xf32>
    %c0_5 = arith.constant 0 : index
    %c0_6 = arith.constant 0 : index
    %4 = vector.load %arg3[%c0_5, %c0_6] : memref<3x64xf32, #tpu.memory_space<vmem>>, vector<3x64xf32>
    %cst_7 = arith.constant dense<0.000000e+00> : vector<2x64xf32>
    %5 = tpu.matmul %3, %4, %cst_7 {dimension_numbers = #tpu.dot_dimension_numbers<[1], [0], [0], [1], [0, 0, 1, 1], [], []>} : vector<2x3xf32>, vector<3x64xf32>, vector<2x64xf32> -> vector<2x64xf32>
    %6 = arith.addf %2, %5 : vector<2x64xf32>
    %c0_8 = arith.constant 0 : index
    %c0_9 = arith.constant 0 : index
    %7 = vector.load %arg4[%c0_8, %c0_9] : memref<1x64xf32, #tpu.memory_space<vmem>>, vector<1x64xf32>
    %8 = vector.broadcast %7 : vector<1x64xf32> to vector<2x64xf32>
    %9 = arith.addf %6, %8 : vector<2x64xf32>
    %10 = arith.negf %9 : vector<2x64xf32>
    %11 = math.exp %10 : vector<2x64xf32>
    %cst_10 = arith.constant 1.000000e+00 : f32
    %12 = vector.broadcast %cst_10 : f32 to vector<2x64xf32>
    %13 = arith.addf %12, %11 : vector<2x64xf32>
    %14 = arith.divf %12, %13 : vector<2x64xf32>
    %15 = arith.mulf %9, %14 : vector<2x64xf32>
    %c0_11 = arith.constant 0 : index
    %c0_12 = arith.constant 0 : index
    %16 = vector.load %arg5[%c0_11, %c0_12] : memref<64x64xf32, #tpu.memory_space<vmem>>, vector<64x64xf32>
    %c0_13 = arith.constant 0 : index
    %c0_14 = arith.constant 0 : index
    %17 = vector.load %arg6[%c0_13, %c0_14] : memref<1x64xf32, #tpu.memory_space<vmem>>, vector<1x64xf32>
    %cst_15 = arith.constant dense<0.000000e+00> : vector<2x64xf32>
    %18 = tpu.matmul %15, %16, %cst_15 {dimension_numbers = #tpu.dot_dimension_numbers<[1], [0], [0], [1], [0, 0, 1, 1], [], []>} : vector<2x64xf32>, vector<64x64xf32>, vector<2x64xf32> -> vector<2x64xf32>
    %19 = vector.broadcast %17 : vector<1x64xf32> to vector<2x64xf32>
    %20 = arith.addf %18, %19 : vector<2x64xf32>
    %21 = arith.negf %20 : vector<2x64xf32>
    %22 = math.exp %21 : vector<2x64xf32>
    %cst_16 = arith.constant 1.000000e+00 : f32
    %23 = vector.broadcast %cst_16 : f32 to vector<2x64xf32>
    %24 = arith.addf %23, %22 : vector<2x64xf32>
    %25 = arith.divf %23, %24 : vector<2x64xf32>
    %26 = arith.mulf %20, %25 : vector<2x64xf32>
    %c0_17 = arith.constant 0 : index
    %c0_18 = arith.constant 0 : index
    %27 = vector.load %arg7[%c0_17, %c0_18] : memref<2x64xf32, #tpu.memory_space<vmem>>, vector<2x64xf32>
    %c0_19 = arith.constant 0 : index
    %c0_20 = arith.constant 0 : index
    %28 = vector.load %arg8[%c0_19, %c0_20] : memref<2x1xf32, #tpu.memory_space<vmem>>, vector<2x1xf32>
    %cst_21 = arith.constant dense<0.000000e+00> : vector<2x2xf32>
    %29 = tpu.matmul %27, %26, %cst_21 {dimension_numbers = #tpu.dot_dimension_numbers<[1], [1], [0], [0], [0, 0, 1, 0], [], []>} : vector<2x64xf32>, vector<2x64xf32>, vector<2x2xf32> -> vector<2x2xf32>
    %30 = vector.broadcast %28 : vector<2x1xf32> to vector<2x2xf32>
    %31 = arith.addf %29, %30 : vector<2x2xf32>
    %c0_22 = arith.constant 0 : index
    %c0_23 = arith.constant 0 : index
    %32 = vector.load %arg9[%c0_22, %c0_23] : memref<2x2xf32, #tpu.memory_space<vmem>>, vector<2x2xf32>
    tpu.vector_store %arg9[%c0_22, %c0_23], %31 {strides = array<i32>} : memref<2x2xf32, #tpu.memory_space<vmem>>, vector<2x2xf32>,
    return
  }
}

</mosaic_0001>

<llo_original>
// kernel: tpu_custom_call.1
$region0: #{tpu_custom_call.1}
  #allocation0 [shape = 'u32[]', space=smem, size = 0x4, offset = 0x4, fixed_abs, tag = 'smem constant byte address 0x4 - core index']
  #allocation1 [shape = 'u32[144,128]{1,0:T(1,128)}', space=vmem, size = 0x12000, scoped, tag = 'internal scratch']
  %s0 = inlined_call_operand.vmem [shape: f32[2,11], index: 0, kind: input, shape index: {}]
  %s1 = inlined_call_operand.hbm [shape: f32[2,3], index: 1, kind: input, shape index: {}]
  %s2 = inlined_call_operand.hbm [shape: f32[11,64], index: 2, kind: input, shape index: {}]
  %s3 = inlined_call_operand.vmem [shape: f32[3,64], index: 3, kind: input, shape index: {}]
  %s4 = inlined_call_operand.vmem [shape: f32[1,64], index: 4, kind: input, shape index: {}]
  %s5 = inlined_call_operand.hbm [shape: f32[64,64], index: 5, kind: input, shape index: {}]
  %s6 = inlined_call_operand.vmem [shape: f32[1,64], index: 6, kind: input, shape index: {}]
  %s7 = inlined_call_operand.vmem [shape: f32[2,64], index: 7, kind: input, shape index: {}]
  %s8 = inlined_call_operand.vmem [shape: f32[2,1], index: 8, kind: input, shape index: {}]
  %s9 = inlined_call_operand.hbm [shape: f32[2,2], index: 9, kind: output, shape index: {}]
  %s10 = sld [smem:[#allocation0]]
  $region58: #{tpu_custom_call.1} parent=0
    _
  %s12 = ssub.s32 1, %s10
  %s13 = scalar_select 0, %s12, %s10
  $region1: #{tpu_custom_call.1} parent=0
    #allocation2 [shape = 'u8[1024]{0}', space=vmem, size = 0x400, scoped, tag = 'input window, operand 1, single buffered']
    #allocation3 [shape = 's32[1]{0}', space=sflag, size = 0x4, scoped, tag = 'scoped memory for tpu_custom_call.1']
    #allocation4 [shape = 's32[1]{0}', space=sflag, size = 0x4, scoped, tag = 'scoped memory for tpu_custom_call.1']
    #allocation5 [shape = 'u8[8192]{0}', space=vmem, size = 0x2000, scoped, tag = 'input window, operand 2, single buffered']
    #allocation6 [shape = 's32[1]{0}', space=sflag, size = 0x4, scoped, tag = 'scoped memory for tpu_custom_call.1']
    #allocation7 [shape = 'u8[32768]{0}', space=vmem, size = 0x8000, scoped, tag = 'input window, operand 5, single buffered']
    #allocation8 [shape = 'u8[1024]{0}', space=vmem, size = 0x400, scoped, tag = 'output window, operand 0, single buffered']
    %14 = vsyncpa [#allocation3], 0
    %15 = vsyncpa [#allocation6], 0
    %16 = vsyncpa [#allocation4], 0
    // Predicated region
    $region2: #{tpu_custom_call.1} parent=1 // pred_check
      _
    $region3: #{tpu_custom_call.1} parent=1 // pred_check_branch
      %18 = sbr.rel (0) target = $region5
    $region4: #{tpu_custom_call.1} parent=1 // pred_region
      _
    $region5: #{tpu_custom_call.1} parent=1 // pred_fallthru
      _
    // Predicated region
    $region6: #{tpu_custom_call.1} parent=1 // pred_check
      _
    $region7: #{tpu_custom_call.1} parent=1 // pred_check_branch
      %20 = sbr.rel (0) target = $region9
    $region8: #{tpu_custom_call.1} parent=1 // pred_region
      %s22 = ssub.s32 32, 32
      %23 = vsyncadd [#allocation3], %s22
      %s25 = sshll.u32 [#allocation2], 4
      %s26 = int_to_ptr.vmem [resolvable:$true] %s25
      %28 = dma.hbm_to_vmem [thread:$0]  %s1, 32, %s26, [#allocation3]
    $region9: #{tpu_custom_call.1} parent=1 // pred_fallthru
      _
    // Predicated region
    $region10: #{tpu_custom_call.1} parent=1 // pred_check
      _
    $region11: #{tpu_custom_call.1} parent=1 // pred_check_branch
      %30 = sbr.rel (0) target = $region13
    $region12: #{tpu_custom_call.1} parent=1 // pred_region
      %s32 = ssub.s32 256, 256
      %33 = vsyncadd [#allocation6], %s32
      %s34 = sshll.u32 [#allocation5], 4
      %s35 = int_to_ptr.vmem [resolvable:$true] %s34
      %40 = dma.hbm_to_vmem [thread:$0]  %s2, 256, %s35, [#allocation6], 128, 128, 8
    $region13: #{tpu_custom_call.1} parent=1 // pred_fallthru
      _
    // Predicated region
    $region14: #{tpu_custom_call.1} parent=1 // pred_check
      _
    $region15: #{tpu_custom_call.1} parent=1 // pred_check_branch
      %42 = sbr.rel (0) target = $region17
    $region16: #{tpu_custom_call.1} parent=1 // pred_region
      _
    $region17: #{tpu_custom_call.1} parent=1 // pred_fallthru
      _
    // Predicated region
    $region18: #{tpu_custom_call.1} parent=1 // pred_check
      _
    $region19: #{tpu_custom_call.1} parent=1 // pred_check_branch
      %44 = sbr.rel (0) target = $region21
    $region20: #{tpu_custom_call.1} parent=1 // pred_region
      _
    $region21: #{tpu_custom_call.1} parent=1 // pred_fallthru
      _
    // Predicated region
    $region22: #{tpu_custom_call.1} parent=1 // pred_check
      _
    $region23: #{tpu_custom_call.1} parent=1 // pred_check_branch
      %46 = sbr.rel (0) target = $region25
    $region24: #{tpu_custom_call.1} parent=1 // pred_region
      %s48 = ssub.s32 1024, 1024
      %49 = vsyncadd [#allocation6], %s48
      %s50 = sshll.u32 [#allocation7], 4
      %s51 = int_to_ptr.vmem [resolvable:$true] %s50
      %56 = dma.hbm_to_vmem [thread:$0]  %s5, 1024, %s51, [#allocation6], 128, 128, 8
    $region25: #{tpu_custom_call.1} parent=1 // pred_fallthru
      _
    // Predicated region
    $region26: #{tpu_custom_call.1} parent=1 // pred_check
      _
    $region27: #{tpu_custom_call.1} parent=1 // pred_check_branch
      %58 = sbr.rel (0) target = $region29
    $region28: #{tpu_custom_call.1} parent=1 // pred_region
      _
    $region29: #{tpu_custom_call.1} parent=1 // pred_fallthru
      _
    // Predicated region
    $region30: #{tpu_custom_call.1} parent=1 // pred_check
      _
    $region31: #{tpu_custom_call.1} parent=1 // pred_check_branch
      %60 = sbr.rel (0) target = $region33
    $region32: #{tpu_custom_call.1} parent=1 // pred_region
      _
    $region33: #{tpu_custom_call.1} parent=1 // pred_fallthru
      _
    // Predicated region
    $region34: #{tpu_custom_call.1} parent=1 // pred_check
      _
    $region35: #{tpu_custom_call.1} parent=1 // pred_check_branch
      %62 = sbr.rel (0) target = $region37
    $region36: #{tpu_custom_call.1} parent=1 // pred_region
      _
    $region37: #{tpu_custom_call.1} parent=1 // pred_fallthru
      _
    // Predicated region
    $region38: #{tpu_custom_call.1} parent=1 // pred_check
      _
    $region39: #{tpu_custom_call.1} parent=1 // pred_check_branch
      %64 = sbr.rel (0) target = $region41
    $region40: #{tpu_custom_call.1} parent=1 // pred_region
      %65 = dma.done [#allocation3], 32
    $region41: #{tpu_custom_call.1} parent=1 // pred_fallthru
      _
    // Predicated region
    $region42: #{tpu_custom_call.1} parent=1 // pred_check
      _
    $region43: #{tpu_custom_call.1} parent=1 // pred_check_branch
      %67 = sbr.rel (0) target = $region45
    $region44: #{tpu_custom_call.1} parent=1 // pred_region
      %68 = dma.done [#allocation6], 256
    $region45: #{tpu_custom_call.1} parent=1 // pred_fallthru
      _
    // Predicated region
    $region46: #{tpu_custom_call.1} parent=1 // pred_check
      _
    $region47: #{tpu_custom_call.1} parent=1 // pred_check_branch
      %70 = sbr.rel (0) target = $region49
    $region48: #{tpu_custom_call.1} parent=1 // pred_region
      %71 = dma.done [#allocation6], 1024
    $region49: #{tpu_custom_call.1} parent=1 // pred_fallthru
      _
    %v72 = vld [vmem:[%s0] sm:$0x3]
    %v73 = vld [vmem:[#allocation5] sm:$0xff]
    %v74 = vld [vmem:[#allocation5 + $0x8] sm:$0x7]
    %v75 = vld [vmem:[#allocation2] sm:$0x3]
    %v76 = vld [vmem:[%s3] sm:$0x7]
    %vm77 = vcmask 23552
    %v79 = vsel %vm77, %v75, 0
    %vm81 = vcmask 1042432
    %v83 = vsel %vm81, %v76, 0
    %85 = vmatprep.subr.mxu0 0.0
    %86 = vmatpush1.msra.mxu0 %v83
    %87 = vmatprep.subr.mxu0 0.0
    %88 = vmatpush1.msra.mxu0 0.0
    %89 = vmatprep.subr.mxu0 0.0
    %90 = vmatpush1.msra.mxu0 0.0
    %91 = vmatprep.subr.mxu0 0.0
    %92 = vmatpush1.msra.mxu0 0.0
    %93 = vmatprep.subr.mxu0 0.0
    %94 = vmatpush1.msra.mxu0 0.0
    %95 = vmatprep.subr.mxu0 0.0
    %96 = vmatpush1.msra.mxu0 0.0
    %97 = vmatprep.subr.mxu0 0.0
    %98 = vmatpush1.msra.mxu0 0.0
    %99 = vmatprep.subr.mxu0 0.0
    %100 = vmatpush1.msra.mxu0 0.0
    %101 = vmatprep.subr.mxu0 0.0
    %102 = vmatpush1.msra.mxu0 0.0
    %103 = vmatprep.subr.mxu0 0.0
    %104 = vmatpush1.msra.mxu0 0.0
    %105 = vmatprep.subr.mxu0 0.0
    %106 = vmatpush1.msra.mxu0 0.0
    %107 = vmatprep.subr.mxu0 0.0
    %108 = vmatpush1.msra.mxu0 0.0
    %109 = vmatprep.subr.mxu0 0.0
    %110 = vmatpush1.msra.mxu0 0.0
    %111 = vmatprep.subr.mxu0 0.0
    %112 = vmatpush1.msra.mxu0 0.0
    %113 = vmatprep.subr.mxu0 0.0
    %114 = vmatpush1.msra.mxu0 0.0
    %115 = vmatprep.subr.mxu0 0.0
    %116 = vmatpush1.msra.mxu0 0.0
    %117 = vmatprep.subr.mxu0 0.0
    %118 = vmatpush1.msra.mxu0 0.0
    %119 = vmatprep.subr.mxu0 0.0
    %120 = vmatpush1.msra.mxu0 0.0
    %121 = vmatprep.subr.mxu0 0.0
    %122 = vmatpush1.msra.mxu0 0.0
    %123 = vmatprep.subr.mxu0 0.0
    %124 = vmatpush1.msra.mxu0 0.0
    %125 = vmatprep.subr.mxu0 0.0
    %126 = vmatpush1.msra.mxu0 0.0
    %127 = vmatprep.subr.mxu0 0.0
    %128 = vmatpush1.msra.mxu0 0.0
    %129 = vmatprep.subr.mxu0 0.0
    %130 = vmatpush1.msra.mxu0 0.0
    %131 = vmatprep.subr.mxu0 0.0
    %132 = vmatpush1.msra.mxu0 0.0
    %133 = vmatprep.subr.mxu0 0.0
    %134 = vmatpush1.msra.mxu0 0.0
    %135 = vmatprep.subr.mxu0 0.0
    %136 = vmatpush1.msra.mxu0 0.0
    %137 = vmatprep.subr.mxu0 0.0
    %138 = vmatpush1.msra.mxu0 0.0
    %139 = vmatprep.subr.mxu0 0.0
    %140 = vmatpush1.msra.mxu0 0.0
    %141 = vmatprep.subr.mxu0 0.0
    %142 = vmatpush1.msra.mxu0 0.0
    %143 = vmatprep.subr.mxu0 0.0
    %144 = vmatpush1.msra.mxu0 0.0
    %145 = vmatprep.subr.mxu0 0.0
    %146 = vmatpush1.msra.mxu0 0.0
    %147 = vmatprep.subr.mxu0 0.0
    %148 = vmatpush1.msra.mxu0 0.0
    %149 = vmatprep.mubr.f32.mxu0 0.0
    %150 = vmatmul.mubr.f32.gmra.mrb[0].mxu0 %v79
    %v151 = vpop.f32.mrb[0].mxu0
    %v152 = vadd.f32 0.0, %v151
    %v153 = vpop.f32.mrb[0].mxu0
    %154 = vdwg.mxu0
    %vm155 = vcmask 89088
    %v157 = vsel %vm155, %v72, 0
    %v160 = vsel %vm81, %v74, 0
    %162 = vmatprep.subr.mxu0 0.0
    %163 = vmatpush1.msra.mxu0 %v73
    %164 = vmatprep.subr.mxu0 0.0
    %165 = vmatpush1.msra.mxu0 %v160
    %166 = vmatprep.subr.mxu0 0.0
    %167 = vmatpush1.msra.mxu0 0.0
    %168 = vmatprep.subr.mxu0 0.0
    %169 = vmatpush1.msra.mxu0 0.0
    %170 = vmatprep.subr.mxu0 0.0
    %171 = vmatpush1.msra.mxu0 0.0
    %172 = vmatprep.subr.mxu0 0.0
    %173 = vmatpush1.msra.mxu0 0.0
    %174 = vmatprep.subr.mxu0 0.0
    %175 = vmatpush1.msra.mxu0 0.0
    %176 = vmatprep.subr.mxu0 0.0
    %177 = vmatpush1.msra.mxu0 0.0
    %178 = vmatprep.subr.mxu0 0.0
    %179 = vmatpush1.msra.mxu0 0.0
    %180 = vmatprep.subr.mxu0 0.0
    %181 = vmatpush1.msra.mxu0 0.0
    %182 = vmatprep.subr.mxu0 0.0
    %183 = vmatpush1.msra.mxu0 0.0
    %184 = vmatprep.subr.mxu0 0.0
    %185 = vmatpush1.msra.mxu0 0.0
    %186 = vmatprep.subr.mxu0 0.0
    %187 = vmatpush1.msra.mxu0 0.0
    %188 = vmatprep.subr.mxu0 0.0
    %189 = vmatpush1.msra.mxu0 0.0
    %190 = vmatprep.subr.mxu0 0.0
    %191 = vmatpush1.msra.mxu0 0.0
    %192 = vmatprep.subr.mxu0 0.0
    %193 = vmatpush1.msra.mxu0 0.0
    %194 = vmatprep.subr.mxu0 0.0
    %195 = vmatpush1.msra.mxu0 0.0
    %196 = vmatprep.subr.mxu0 0.0
    %197 = vmatpush1.msra.mxu0 0.0
    %198 = vmatprep.subr.mxu0 0.0
    %199 = vmatpush1.msra.mxu0 0.0
    %200 = vmatprep.subr.mxu0 0.0
    %201 = vmatpush1.msra.mxu0 0.0
    %202 = vmatprep.subr.mxu0 0.0
    %203 = vmatpush1.msra.mxu0 0.0
    %204 = vmatprep.subr.mxu0 0.0
    %205 = vmatpush1.msra.mxu0 0.0
    %206 = vmatprep.subr.mxu0 0.0
    %207 = vmatpush1.msra.mxu0 0.0
    %208 = vmatprep.subr.mxu0 0.0
    %209 = vmatpush1.msra.mxu0 0.0
    %210 = vmatprep.subr.mxu0 0.0
    %211 = vmatpush1.msra.mxu0 0.0
    %212 = vmatprep.subr.mxu0 0.0
    %213 = vmatpush1.msra.mxu0 0.0
    %214 = vmatprep.subr.mxu0 0.0
    %215 = vmatpush1.msra.mxu0 0.0
    %216 = vmatprep.subr.mxu0 0.0
    %217 = vmatpush1.msra.mxu0 0.0
    %218 = vmatprep.subr.mxu0 0.0
    %219 = vmatpush1.msra.mxu0 0.0
    %220 = vmatprep.subr.mxu0 0.0
    %221 = vmatpush1.msra.mxu0 0.0
    %222 = vmatprep.subr.mxu0 0.0
    %223 = vmatpush1.msra.mxu0 0.0
    %224 = vmatprep.subr.mxu0 0.0
    %225 = vmatpush1.msra.mxu0 0.0
    %226 = vmatprep.mubr.f32.mxu0 0.0
    %227 = vmatmul.mubr.f32.gmra.mrb[0].mxu0 %v157
    %v228 = vpop.f32.mrb[0].mxu0
    %v229 = vadd.f32 %v152, %v228
    %v230 = vpop.f32.mrb[0].mxu0
    %231 = vdwg.mxu0
    %v232 = vld [vmem:[%s4] sm:$0x1]
    %v234 = vlaneseq
    %v235 = vshrl.u32 %v234, 7
    %v236 = vsub.s32 0, %v235
    %v237 = vrot.slane %v232, %v236
    %v239 = vadd.f32 %v229, %v237
    %v240 = vxor.u32 %v239, 2147483648
    %v241 = vmul.f32 %v240, 1.442695
    %v242 = vpow.pop %v241
    %v243 = vadd.f32 %v242, 1.0
    %v244 = vrcp.pop %v243
    %v245 = vmul.f32 1.0, %v244
    %v246 = vmul.f32 %v239, %v245
    %v247 = vld [vmem:[#allocation7] sm:$0xff]
    %v248 = vld [vmem:[#allocation7 + $0x8] sm:$0xff]
    %v249 = vld [vmem:[#allocation7 + $0x10] sm:$0xff]
    %v250 = vld [vmem:[#allocation7 + $0x18] sm:$0xff]
    %v251 = vld [vmem:[#allocation7 + $0x20] sm:$0xff]
    %v252 = vld [vmem:[#allocation7 + $0x28] sm:$0xff]
    %v253 = vld [vmem:[#allocation7 + $0x30] sm:$0xff]
    %v254 = vld [vmem:[#allocation7 + $0x38] sm:$0xff]
    %v255 = vld [vmem:[%s6] sm:$0x1]
    %v257 = vlaneseq
    %v258 = vshrl.u32 %v257, 7
    %v259 = vsub.s32 0, %v258
    %v260 = vrot.slane %v255, %v259
    %vm262 = vcmask 523264
    %v264 = vsel %vm262, %v246, 0
    %266 = vmatprep.subr.mxu0 0.0
    %267 = vmatpush1.msra.mxu0 %v247
    %268 = vmatprep.subr.mxu0 0.0
    %269 = vmatpush1.msra.mxu0 %v248
    %270 = vmatprep.subr.mxu0 0.0
    %271 = vmatpush1.msra.mxu0 %v249
    %272 = vmatprep.subr.mxu0 0.0
    %273 = vmatpush1.msra.mxu0 %v250
    %274 = vmatprep.subr.mxu0 0.0
    %275 = vmatpush1.msra.mxu0 %v251
    %276 = vmatprep.subr.mxu0 0.0
    %277 = vmatpush1.msra.mxu0 %v252
    %278 = vmatprep.subr.mxu0 0.0
    %279 = vmatpush1.msra.mxu0 %v253
    %280 = vmatprep.subr.mxu0 0.0
    %281 = vmatpush1.msra.mxu0 %v254
    %282 = vmatprep.subr.mxu0 0.0
    %283 = vmatpush1.msra.mxu0 0.0
    %284 = vmatprep.subr.mxu0 0.0
    %285 = vmatpush1.msra.mxu0 0.0
    %286 = vmatprep.subr.mxu0 0.0
    %287 = vmatpush1.msra.mxu0 0.0
    %288 = vmatprep.subr.mxu0 0.0
    %289 = vmatpush1.msra.mxu0 0.0
    %290 = vmatprep.subr.mxu0 0.0
    %291 = vmatpush1.msra.mxu0 0.0
    %292 = vmatprep.subr.mxu0 0.0
    %293 = vmatpush1.msra.mxu0 0.0
    %294 = vmatprep.subr.mxu0 0.0
    %295 = vmatpush1.msra.mxu0 0.0
    %296 = vmatprep.subr.mxu0 0.0
    %297 = vmatpush1.msra.mxu0 0.0
    %298 = vmatprep.subr.mxu0 0.0
    %299 = vmatpush1.msra.mxu0 0.0
    %300 = vmatprep.subr.mxu0 0.0
    %301 = vmatpush1.msra.mxu0 0.0
    %302 = vmatprep.subr.mxu0 0.0
    %303 = vmatpush1.msra.mxu0 0.0
    %304 = vmatprep.subr.mxu0 0.0
    %305 = vmatpush1.msra.mxu0 0.0
    %306 = vmatprep.subr.mxu0 0.0
    %307 = vmatpush1.msra.mxu0 0.0
    %308 = vmatprep.subr.mxu0 0.0
    %309 = vmatpush1.msra.mxu0 0.0
    %310 = vmatprep.subr.mxu0 0.0
    %311 = vmatpush1.msra.mxu0 0.0
    %312 = vmatprep.subr.mxu0 0.0
    %313 = vmatpush1.msra.mxu0 0.0
    %314 = vmatprep.subr.mxu0 0.0
    %315 = vmatpush1.msra.mxu0 0.0
    %316 = vmatprep.subr.mxu0 0.0
    %317 = vmatpush1.msra.mxu0 0.0
    %318 = vmatprep.subr.mxu0 0.0
    %319 = vmatpush1.msra.mxu0 0.0
    %320 = vmatprep.subr.mxu0 0.0
    %321 = vmatpush1.msra.mxu0 0.0
    %322 = vmatprep.subr.mxu0 0.0
    %323 = vmatpush1.msra.mxu0 0.0
    %324 = vmatprep.subr.mxu0 0.0
    %325 = vmatpush1.msra.mxu0 0.0
    %326 = vmatprep.subr.mxu0 0.0
    %327 = vmatpush1.msra.mxu0 0.0
    %328 = vmatprep.subr.mxu0 0.0
    %329 = vmatpush1.msra.mxu0 0.0
    %330 = vmatprep.mubr.f32.mxu0 0.0
    %331 = vmatmul.mubr.f32.gmra.mrb[0].mxu0 %v264
    %v332 = vpop.f32.mrb[0].mxu0
    %v333 = vadd.f32 %v260, %v332
    %v334 = vpop.f32.mrb[0].mxu0
    %335 = vdwg.mxu0
    %v336 = vxor.u32 %v333, 2147483648
    %v337 = vmul.f32 %v336, 1.442695
    %v338 = vpow.pop %v337
    %v339 = vadd.f32 %v338, 1.0
    %v340 = vrcp.pop %v339
    %v341 = vmul.f32 1.0, %v340
    %v342 = vmul.f32 %v333, %v341
    %v343 = vld [vmem:[%s7] sm:$0x3]
    %v344 = vld [vmem:[%s8] sm:$0x3]
    %346 = vset.pattern.permute.xlu0 0
    %347 = vperm.xlu0 %346, %v344
    %v348 = vpop.permute.xlu0 %347
    %v351 = vsel %vm262, %v343, 0
    %v354 = vsel %vm262, %v342, 0
    %356 = vmatprep.subr.mxu0 0.0
    %357 = vmatpush1.xpose.msra.mxu0 %v354
    %358 = vmatprep.subr.mxu0 0.0
    %359 = vmatpush1.xpose.msra.mxu0 0.0
    %360 = vmatprep.subr.mxu0 0.0
    %361 = vmatpush1.xpose.msra.mxu0 0.0
    %362 = vmatprep.subr.mxu0 0.0
    %363 = vmatpush1.xpose.msra.mxu0 0.0
    %364 = vmatprep.subr.mxu0 0.0
    %365 = vmatpush1.xpose.msra.mxu0 0.0
    %366 = vmatprep.subr.mxu0 0.0
    %367 = vmatpush1.xpose.msra.mxu0 0.0
    %368 = vmatprep.subr.mxu0 0.0
    %369 = vmatpush1.xpose.msra.mxu0 0.0
    %370 = vmatprep.subr.mxu0 0.0
    %371 = vmatpush1.xpose.msra.mxu0 0.0
    %372 = vmatprep.subr.mxu0 0.0
    %373 = vmatpush1.xpose.msra.mxu0 0.0
    %374 = vmatprep.subr.mxu0 0.0
    %375 = vmatpush1.xpose.msra.mxu0 0.0
    %376 = vmatprep.subr.mxu0 0.0
    %377 = vmatpush1.xpose.msra.mxu0 0.0
    %378 = vmatprep.subr.mxu0 0.0
    %379 = vmatpush1.xpose.msra.mxu0 0.0
    %380 = vmatprep.subr.mxu0 0.0
    %381 = vmatpush1.xpose.msra.mxu0 0.0
    %382 = vmatprep.subr.mxu0 0.0
    %383 = vmatpush1.xpose.msra.mxu0 0.0
    %384 = vmatprep.subr.mxu0 0.0
    %385 = vmatpush1.xpose.msra.mxu0 0.0
    %386 = vmatprep.subr.mxu0 0.0
    %387 = vmatpush1.xpose.msra.mxu0 0.0
    %388 = vmatprep.subr.mxu0 0.0
    %389 = vmatpush1.xpose.msra.mxu0 0.0
    %390 = vmatprep.subr.mxu0 0.0
    %391 = vmatpush1.xpose.msra.mxu0 0.0
    %392 = vmatprep.subr.mxu0 0.0
    %393 = vmatpush1.xpose.msra.mxu0 0.0
    %394 = vmatprep.subr.mxu0 0.0
    %395 = vmatpush1.xpose.msra.mxu0 0.0
    %396 = vmatprep.subr.mxu0 0.0
    %397 = vmatpush1.xpose.msra.mxu0 0.0
    %398 = vmatprep.subr.mxu0 0.0
    %399 = vmatpush1.xpose.msra.mxu0 0.0
    %400 = vmatprep.subr.mxu0 0.0
    %401 = vmatpush1.xpose.msra.mxu0 0.0
    %402 = vmatprep.subr.mxu0 0.0
    %403 = vmatpush1.xpose.msra.mxu0 0.0
    %404 = vmatprep.subr.mxu0 0.0
    %405 = vmatpush1.xpose.msra.mxu0 0.0
    %406 = vmatprep.subr.mxu0 0.0
    %407 = vmatpush1.xpose.msra.mxu0 0.0
    %408 = vmatprep.subr.mxu0 0.0
    %409 = vmatpush1.xpose.msra.mxu0 0.0
    %410 = vmatprep.subr.mxu0 0.0
    %411 = vmatpush1.xpose.msra.mxu0 0.0
    %412 = vmatprep.subr.mxu0 0.0
    %413 = vmatpush1.xpose.msra.mxu0 0.0
    %414 = vmatprep.subr.mxu0 0.0
    %415 = vmatpush1.xpose.msra.mxu0 0.0
    %416 = vmatprep.subr.mxu0 0.0
    %417 = vmatpush1.xpose.msra.mxu0 0.0
    %418 = vmatprep.subr.mxu0 0.0
    %419 = vmatpush1.xpose.msra.mxu0 0.0
    %420 = vmatprep.mubr.f32.mxu0 0.0
    %421 = vmatmul.mubr.f32.gmra.mrb[0].mxu0 %v351
    %v422 = vpop.f32.mrb[0].mxu0
    %v423 = vadd.f32 %v348, %v422
    %v424 = vpop.f32.mrb[0].mxu0
    %425 = vdwg.mxu0
    %vm426 = vcmask 9216
    %427 = vst.msk [vmem:[#allocation8] sm:$0x3] %vm426, %v423
    // Predicated region
    $region50: #{tpu_custom_call.1} parent=1 // pred_check
      _
    $region51: #{tpu_custom_call.1} parent=1 // pred_check_branch
      %429 = sbr.rel (0) target = $region53
    $region52: #{tpu_custom_call.1} parent=1 // pred_region
      %s431 = ssub.s32 32, 32
      %432 = vsyncadd [#allocation4], %s431
      %s434 = sshll.u32 [#allocation8], 4
      %s435 = int_to_ptr.vmem [resolvable:$true] %s434
      %437 = dma.vmem_to_hbm [thread:$0]  %s435, 32, %s9, [#allocation4]
    $region53: #{tpu_custom_call.1} parent=1 // pred_fallthru
      _
    // Predicated region
    $region54: #{tpu_custom_call.1} parent=1 // pred_check
      _
    $region55: #{tpu_custom_call.1} parent=1 // pred_check_branch
      %439 = sbr.rel (0) target = $region57
    $region56: #{tpu_custom_call.1} parent=1 // pred_region
      %440 = dma.done [#allocation4], 32
    $region57: #{tpu_custom_call.1} parent=1 // pred_fallthru
      _
    %441 = vsyncpa [#allocation3], 1
    %442 = vsyncpa [#allocation6], 1
    %443 = vsyncpa [#allocation4], 1

</llo_original>
